<compile_context>
chip_gen: v7x
topology: tpu7x:2x2x1
jax: 0.10.0
libtpu: 0.0.40
codegen_flags: <defaults>
</compile_context>

<pallas_src>
import functools

import jax
import jax.numpy as jnp
from jax.experimental import pallas as pl
from jax.experimental.pallas import tpu as pltpu


def _round_up(a, m):
    return (a + m - 1) // m * m


def prime_kernel(x_ref, w_ref, b_ref, o_ref, *, p, f):
    """One batch tile of sigmoid(x @ w + b), lane-packed.

    x_ref: [TBp, P*F]  VMEM (P original rows per 128-lane packed row)
    w_ref: [1,   P*F]  VMEM (weights tiled P times, resident across the grid)
    b_ref: [1, 1]      SMEM scalar
    o_ref: [Rb, 128]   VMEM lane-dense output slab, Rb*128 == TBp*P
    """
    prod = x_ref[...] * w_ref[...]                    # VPU, full 128-lane vregs
    tbp = prod.shape[0]
    # Segmented reduce: sum each F-lane segment (one original row) -> [TBp, P].
    logits = prod.reshape(tbp, p, f).sum(axis=-1)     # XLU (has slack here)
    logits = logits + b_ref[0, 0]                     # scalar bias from SMEM
    sig = jax.nn.sigmoid(logits)                      # EUP
    # Lane-dense store: flat order == original batch order within the tile.
    o_ref[...] = sig.reshape(o_ref.shape).astype(o_ref.dtype)


def prime_model(x, w, b, *, tbp=4096):
    """sigmoid(x @ w + b).

    x: [B, F] f32, w: [F, 1] f32 (PyTorch fc1.weight transposed), b: [1]/[1,1].
    Returns [B, 1] f32.
    tbp: target packed rows (128 lanes each) per grid step (~2 MiB at f32).
    """
    B, F = x.shape
    x = x.astype(jnp.float32)
    w_row = jnp.reshape(w, (1, F)).astype(jnp.float32)
    b_s = jnp.reshape(b, (1, 1)).astype(jnp.float32)

    # ---- Lane packing (zero-copy reshape) --------------------------------
    if F < 128 and 128 % F == 0 and B % (128 // F) == 0:
        P = 128 // F
    else:
        P = 1                                   # fallback: unpacked feature dim
    Fp = P * F
    n_packed = B // P
    x_packed = x.reshape(n_packed, Fp)
    w_packed = jnp.tile(w_row, (1, P)) if P > 1 else w_row

    # ---- Tiling ----------------------------------------------------------
    # Per-tile logits must form whole 128-lane output rows; keep the output
    # block's sublane dim a multiple of 8 (or equal to the full dim).
    align = 128 // P            # packed rows per 128-lane output row
    out_align = 8 * align       # packed rows per 8 output rows
    R = pl.cdiv(B, 128)         # lane-dense output slab rows

    if n_packed >= 2 * out_align:
        # Large path: aligned tiles, ragged last block handled by Pallas
        # (no jnp.pad of x, no extra HBM pass).
        TBp = min(_round_up(tbp, out_align),
                  _round_up(pl.cdiv(n_packed, 2), out_align))  # >=2 tiles (v7x)
        Rb = (TBp * P) // 128
        n_rows = n_packed
    else:
        # Small path: one full-array block; pad the (tiny) packed array so the
        # block covers exactly R lane-dense output rows.
        n_rows = R * align
        if n_rows > n_packed:
            x_packed = jnp.pad(x_packed, ((0, n_rows - n_packed), (0, 0)))
        TBp, Rb = n_rows, R

    grid = (pl.cdiv(n_rows, TBp),)

    out = pl.pallas_call(
        functools.partial(prime_kernel, p=P, f=F),
        out_shape=jax.ShapeDtypeStruct((R, 128), jnp.float32),
        grid=grid,
        in_specs=[
            pl.BlockSpec((TBp, Fp), lambda i: (i, 0)),             # x batch tile
            pl.BlockSpec((1, Fp), lambda i: (0, 0)),               # weight row (resident)
            pl.BlockSpec(memory_space=pltpu.MemorySpace.SMEM),     # bias scalar
        ],
        out_specs=pl.BlockSpec((Rb, 128), lambda i: (i, 0)),       # lane-dense slab
        compiler_params=pltpu.CompilerParams(
            dimension_semantics=("parallel",)),                    # v7x 2-TC sharding
    )(x_packed, w_packed, b_s)

    # Slab flat order is the original batch order; slicing the (32x smaller
    # than x) output back to [B, 1] is cheap.
    return out.reshape(-1)[:B].reshape(B, 1)


if __name__ == "__main__":
    key = jax.random.PRNGKey(0)
    kx, kw, kb, kx2 = jax.random.split(key, 4)

    batch = 8
    input_size = 32  # X_test.shape[1]

    # Deterministic synthetic inputs / parameters (PyTorch-like init scale).
    x = jax.random.normal(kx, (batch, input_size), dtype=jnp.float32)
    bound = 1.0 / jnp.sqrt(input_size)
    w = jax.random.uniform(kw, (input_size, 1), minval=-bound, maxval=bound,
                           dtype=jnp.float32)
    b = jax.random.uniform(kb, (1, 1), minval=-bound, maxval=bound,
                           dtype=jnp.float32)

    # Small-batch path (single full-array block, grid=(1,)).
    out = jax.block_until_ready(prime_model(x, w, b))
    ref = jax.nn.sigmoid(x @ w + b)
    assert out.shape == (batch, 1)
    assert jnp.allclose(out, ref, atol=1e-5, rtol=1e-5)

    # Larger batch exercises the tiled grid + ragged last block (no jnp.pad).
    big_batch = 2500
    x_big = jax.random.normal(kx2, (big_batch, input_size), dtype=jnp.float32)
    out_big = jax.block_until_ready(prime_model(x_big, w, b))
    ref_big = jax.nn.sigmoid(x_big @ w + b)
    assert out_big.shape == (big_batch, 1)
    assert jnp.allclose(out_big, ref_big, atol=1e-5, rtol=1e-5)

    print("KERNEL_OK")
</pallas_src>

<mosaic_0001>
module attributes {stable_mosaic.version = 11 : i64} {
  func.func @prime_kernel(%arg0: i32, %arg1: memref<32x128xf32, #tpu.memory_space<vmem>>, %arg2: memref<1x128xf32, #tpu.memory_space<vmem>>, %arg3: memref<1x1xf32, #tpu.memory_space<smem>>, %arg4: memref<1x128xf32, #tpu.memory_space<vmem>>) attributes {dimension_semantics = [#tpu.dimension_semantics<parallel>], iteration_bounds = array<i64: 1>, scalar_prefetch = 0 : i64, scratch_operands = 0 : i64, tpu.core_type = #tpu.core_type<tc>, window_params = [{transform_indices = @transform_0, window_bounds = array<i64: 32, 128>}, {pipeline_mode = #tpu.pipeline_mode<synchronous>, transform_indices = @transform_1, window_bounds = array<i64: 1, 128>}, {transform_indices = @transform_2, window_bounds = array<i64: 1, 1>}, {transform_indices = @transform_3, window_bounds = array<i64: 1, 128>}]} {
    %c0 = arith.constant 0 : index
    %c0_0 = arith.constant 0 : index
    %0 = vector.load %arg1[%c0, %c0_0] : memref<32x128xf32, #tpu.memory_space<vmem>>, vector<32x128xf32>
    %c0_1 = arith.constant 0 : index
    %c0_2 = arith.constant 0 : index
    %1 = vector.load %arg2[%c0_1, %c0_2] : memref<1x128xf32, #tpu.memory_space<vmem>>, vector<1x128xf32>
    %2 = vector.broadcast %1 : vector<1x128xf32> to vector<32x128xf32>
    %3 = arith.mulf %0, %2 : vector<32x128xf32>
    %4 = vector.shape_cast %3 : vector<32x128xf32> to vector<32x4x32xf32>
    %cst = arith.constant dense<0.000000e+00> : vector<32x4xf32>
    %5 = vector.multi_reduction <add>, %4, %cst [2] : vector<32x4x32xf32> to vector<32x4xf32>
    %c0_3 = arith.constant 0 : index
    %c0_4 = arith.constant 0 : index
    %6 = memref.load %arg3[%c0_3, %c0_4] : memref<1x1xf32, #tpu.memory_space<smem>>
    %7 = vector.broadcast %6 : f32 to vector<32x4xf32>
    %8 = arith.addf %5, %7 : vector<32x4xf32>
    %9 = arith.negf %8 : vector<32x4xf32>
    %10 = math.exp %9 : vector<32x4xf32>
    %cst_5 = arith.constant 1.000000e+00 : f32
    %11 = vector.broadcast %cst_5 : f32 to vector<32x4xf32>
    %12 = arith.addf %11, %10 : vector<32x4xf32>
    %13 = arith.divf %11, %12 : vector<32x4xf32>
    %14 = vector.shape_cast %13 : vector<32x4xf32> to vector<1x128xf32>
    %c0_6 = arith.constant 0 : index
    %c0_7 = arith.constant 0 : index
    %15 = vector.load %arg4[%c0_6, %c0_7] : memref<1x128xf32, #tpu.memory_space<vmem>>, vector<1x128xf32>
    tpu.vector_store %arg4[%c0_6, %c0_7], %14 {strides = array<i32>} : memref<1x128xf32, #tpu.memory_space<vmem>>, vector<1x128xf32>,
    return
  }
  func.func @transform_0(%arg0: i32) -> (i32, i32) {
    %c0_i32 = arith.constant 0 : i32
    %c0_i32_0 = arith.constant 0 : i32
    return %arg0, %c0_i32 : i32, i32
  }
  func.func @transform_1(%arg0: i32) -> (i32, i32) {
    %c0_i32 = arith.constant 0 : i32
    %c0_i32_0 = arith.constant 0 : i32
    %c0_i32_1 = arith.constant 0 : i32
    return %c0_i32, %c0_i32_0 : i32, i32
  }
  func.func @transform_2(%arg0: i32) -> (i32, i32) {
    %c0_i32 = arith.constant 0 : i32
    %c0_i32_0 = arith.constant 0 : i32
    %c0_i32_1 = arith.constant 0 : i32
    return %c0_i32, %c0_i32_0 : i32, i32
  }
  func.func @transform_3(%arg0: i32) -> (i32, i32) {
    %c0_i32 = arith.constant 0 : i32
    %c0_i32_0 = arith.constant 0 : i32
    return %arg0, %c0_i32 : i32, i32
  }
}

</mosaic_0001>

<llo_original>
// kernel: tpu_custom_call.1
$region0: #{tpu_custom_call.1}
  #allocation0 [shape = 'u32[]', space=smem, size = 0x4, offset = 0x4, fixed_abs, tag = 'smem constant byte address 0x4 - core index']
  #allocation1 [shape = 'u32[144,128]{1,0:T(1,128)}', space=vmem, size = 0x12000, scoped, tag = 'internal scratch']
  #allocation2 [shape = 'f32[1,1]{1,0:T(1,128)S(6)}', space=smem, size = 0x200, scoped, tag = 'scoped memory for tpu_custom_call.1']
  %s0 = inlined_call_operand.hbm [shape: f32[32,128], index: 0, kind: input, shape index: {}]
  %s1 = inlined_call_operand.vmem [shape: f32[1,128], index: 1, kind: input, shape index: {}]
  %s2 = inlined_call_operand.<no memory space> [shape: f32[1,1], index: 2, kind: input, shape index: {}]
  %s3 = inlined_call_operand.hbm [shape: f32[1,128], index: 3, kind: output, shape index: {}]
  %s4 = sld [smem:[#allocation0]]
  $region26: #{tpu_custom_call.1} parent=0
    _
  %s6 = ssub.s32 1, %s4
  %s7 = scalar_select 0, %s6, %s4
  %8 = sst [smem:[#allocation2]] %s2
  $region1: #{tpu_custom_call.1} parent=0
    #allocation3 [shape = 'u8[16384]{0}', space=vmem, size = 0x4000, scoped, tag = 'input window, operand 0, single buffered']
    #allocation4 [shape = 's32[1]{0}', space=sflag, size = 0x4, scoped, tag = 'scoped memory for tpu_custom_call.1']
    #allocation5 [shape = 's32[1]{0}', space=sflag, size = 0x4, scoped, tag = 'scoped memory for tpu_custom_call.1']
    #allocation6 [shape = 'u8[512]{0}', space=vmem, size = 0x400, scoped, tag = 'output window, operand 0, single buffered']
    %9 = vsyncpa [#allocation4], 0
    %10 = vsyncpa [#allocation5], 0
    // Predicated region
    $region2: #{tpu_custom_call.1} parent=1 // pred_check
      _
    $region3: #{tpu_custom_call.1} parent=1 // pred_check_branch
      %12 = sbr.rel (0) target = $region5
    $region4: #{tpu_custom_call.1} parent=1 // pred_region
      %s14 = ssub.s32 512, 512
      %15 = vsyncadd [#allocation4], %s14
      %s16 = sshll.u32 [#allocation3], 4
      %s17 = int_to_ptr.vmem [resolvable:$true] %s16
      %22 = dma.hbm_to_vmem [thread:$0]  %s0, 512, %s17, [#allocation4], 128, 128, 8
    $region5: #{tpu_custom_call.1} parent=1 // pred_fallthru
      _
    // Predicated region
    $region6: #{tpu_custom_call.1} parent=1 // pred_check
      _
    $region7: #{tpu_custom_call.1} parent=1 // pred_check_branch
      %24 = sbr.rel (0) target = $region9
    $region8: #{tpu_custom_call.1} parent=1 // pred_region
      _
    $region9: #{tpu_custom_call.1} parent=1 // pred_fallthru
      _
    // Predicated region
    $region10: #{tpu_custom_call.1} parent=1 // pred_check
      _
    $region11: #{tpu_custom_call.1} parent=1 // pred_check_branch
      %26 = sbr.rel (0) target = $region13
    $region12: #{tpu_custom_call.1} parent=1 // pred_region
      _
    $region13: #{tpu_custom_call.1} parent=1 // pred_fallthru
      _
    // Predicated region
    $region14: #{tpu_custom_call.1} parent=1 // pred_check
      _
    $region15: #{tpu_custom_call.1} parent=1 // pred_check_branch
      %28 = sbr.rel (0) target = $region17
    $region16: #{tpu_custom_call.1} parent=1 // pred_region
      %29 = dma.done [#allocation4], 512
    $region17: #{tpu_custom_call.1} parent=1 // pred_fallthru
      _
    %v30 = vld [vmem:[#allocation3] sm:$0xff]
    %v31 = vld [vmem:[#allocation3 + $0x8] sm:$0xff]
    %v32 = vld [vmem:[#allocation3 + $0x10] sm:$0xff]
    %v33 = vld [vmem:[#allocation3 + $0x18] sm:$0xff]
    %v34 = vld [vmem:[%s1] sm:$0x1]
    %v36 = vlaneseq
    %v37 = vshrl.u32 %v36, 7
    %v38 = vsub.s32 0, %v37
    %v39 = vrot.slane %v34, %v38
    %v41 = vmul.f32 %v30, %v39
    %v42 = vmul.f32 %v31, %v39
    %v43 = vmul.f32 %v32, %v39
    %v44 = vmul.f32 %v33, %v39
    %49 = vrot.lane.b32.xlu0 %v41, 96
    %v50 = vpop.permute.xlu0 %49
    %51 = vrot.lane.b32.xlu0 %v42, 96
    %v52 = vpop.permute.xlu0 %51
    %53 = vrot.lane.b32.xlu0 %v43, 96
    %v54 = vpop.permute.xlu0 %53
    %55 = vrot.lane.b32.xlu0 %v44, 96
    %v56 = vpop.permute.xlu0 %55
    %61 = vrot.lane.b32.xlu0 %v41, 64
    %v62 = vpop.permute.xlu0 %61
    %63 = vrot.lane.b32.xlu0 %v42, 64
    %v64 = vpop.permute.xlu0 %63
    %65 = vrot.lane.b32.xlu0 %v43, 64
    %v66 = vpop.permute.xlu0 %65
    %67 = vrot.lane.b32.xlu0 %v44, 64
    %v68 = vpop.permute.xlu0 %67
    %73 = vrot.lane.b32.xlu0 %v41, 32
    %v74 = vpop.permute.xlu0 %73
    %75 = vrot.lane.b32.xlu0 %v42, 32
    %v76 = vpop.permute.xlu0 %75
    %77 = vrot.lane.b32.xlu0 %v43, 32
    %v78 = vpop.permute.xlu0 %77
    %79 = vrot.lane.b32.xlu0 %v44, 32
    %v80 = vpop.permute.xlu0 %79
    %v85 = vcombine.low %v41, %v62
    %v86 = vcombine.high %v41, %v62
    %v88 = vunpack.c.l.s4 1983009808
    %v89 = vunpack.c.0.s8 %v88
    %v90 = vlaneseq
    %v91 = vshrl.u32 %v90, 7
    %v92 = vsub.s32 %v89, %v91
    %v93 = vrot.slane %v85, %v92
    %v95 = vunpack.c.l.s4 1983009808
    %v96 = vunpack.c.0.s8 %v95
    %v97 = vlaneseq
    %v98 = vshrl.u32 %v97, 7
    %v99 = vsub.s32 %v96, %v98
    %v100 = vrot.slane %v86, %v99
    %v101 = vcombine.low %v50, %v74
    %v102 = vcombine.high %v50, %v74
    %v104 = vunpack.c.l.s4 1983009808
    %v105 = vunpack.c.0.s8 %v104
    %v106 = vlaneseq
    %v107 = vshrl.u32 %v106, 7
    %v108 = vsub.s32 %v105, %v107
    %v109 = vrot.slane %v101, %v108
    %v111 = vunpack.c.l.s4 1983009808
    %v112 = vunpack.c.0.s8 %v111
    %v113 = vlaneseq
    %v114 = vshrl.u32 %v113, 7
    %v115 = vsub.s32 %v112, %v114
    %v116 = vrot.slane %v102, %v115
    %v117 = vcombine.low %v93, %v109
    %v118 = vcombine.high %v93, %v109
    %v120 = vunpack.c.l.s4 1934713408
    %v121 = vunpack.c.0.s8 %v120
    %v122 = vlaneseq
    %v123 = vshrl.u32 %v122, 7
    %v124 = vsub.s32 %v121, %v123
    %v125 = vrot.slane %v117, %v124
    %v127 = vunpack.c.l.s4 1934713408
    %v128 = vunpack.c.0.s8 %v127
    %v129 = vlaneseq
    %v130 = vshrl.u32 %v129, 7
    %v131 = vsub.s32 %v128, %v130
    %v132 = vrot.slane %v118, %v131
    %v133 = vcombine.low %v100, %v116
    %v134 = vcombine.high %v100, %v116
    %v136 = vunpack.c.l.s4 1934713408
    %v137 = vunpack.c.0.s8 %v136
    %v138 = vlaneseq
    %v139 = vshrl.u32 %v138, 7
    %v140 = vsub.s32 %v137, %v139
    %v141 = vrot.slane %v133, %v140
    %v143 = vunpack.c.l.s4 1934713408
    %v144 = vunpack.c.0.s8 %v143
    %v145 = vlaneseq
    %v146 = vshrl.u32 %v145, 7
    %v147 = vsub.s32 %v144, %v146
    %v148 = vrot.slane %v134, %v147
    %v149 = vcombine.high %v125, 0.0
    %v150 = vcombine.high %v132, 0.0
    %v151 = vcombine.high %v141, 0.0
    %v152 = vcombine.high %v148, 0.0
    %v153 = vcombine.low %v42, %v64
    %v154 = vcombine.high %v42, %v64
    %v156 = vunpack.c.l.s4 1983009808
    %v157 = vunpack.c.0.s8 %v156
    %v158 = vlaneseq
    %v159 = vshrl.u32 %v158, 7
    %v160 = vsub.s32 %v157, %v159
    %v161 = vrot.slane %v153, %v160
    %v163 = vunpack.c.l.s4 1983009808
    %v164 = vunpack.c.0.s8 %v163
    %v165 = vlaneseq
    %v166 = vshrl.u32 %v165, 7
    %v167 = vsub.s32 %v164, %v166
    %v168 = vrot.slane %v154, %v167
    %v169 = vcombine.low %v52, %v76
    %v170 = vcombine.high %v52, %v76
    %v172 = vunpack.c.l.s4 1983009808
    %v173 = vunpack.c.0.s8 %v172
    %v174 = vlaneseq
    %v175 = vshrl.u32 %v174, 7
    %v176 = vsub.s32 %v173, %v175
    %v177 = vrot.slane %v169, %v176
    %v179 = vunpack.c.l.s4 1983009808
    %v180 = vunpack.c.0.s8 %v179
    %v181 = vlaneseq
    %v182 = vshrl.u32 %v181, 7
    %v183 = vsub.s32 %v180, %v182
    %v184 = vrot.slane %v170, %v183
    %v185 = vcombine.low %v161, %v177
    %v186 = vcombine.high %v161, %v177
    %v188 = vunpack.c.l.s4 1934713408
    %v189 = vunpack.c.0.s8 %v188
    %v190 = vlaneseq
    %v191 = vshrl.u32 %v190, 7
    %v192 = vsub.s32 %v189, %v191
    %v193 = vrot.slane %v185, %v192
    %v195 = vunpack.c.l.s4 1934713408
    %v196 = vunpack.c.0.s8 %v195
    %v197 = vlaneseq
    %v198 = vshrl.u32 %v197, 7
    %v199 = vsub.s32 %v196, %v198
    %v200 = vrot.slane %v186, %v199
    %v201 = vcombine.low %v168, %v184
    %v202 = vcombine.high %v168, %v184
    %v204 = vunpack.c.l.s4 1934713408
    %v205 = vunpack.c.0.s8 %v204
    %v206 = vlaneseq
    %v207 = vshrl.u32 %v206, 7
    %v208 = vsub.s32 %v205, %v207
    %v209 = vrot.slane %v201, %v208
    %v211 = vunpack.c.l.s4 1934713408
    %v212 = vunpack.c.0.s8 %v211
    %v213 = vlaneseq
    %v214 = vshrl.u32 %v213, 7
    %v215 = vsub.s32 %v212, %v214
    %v216 = vrot.slane %v202, %v215
    %v217 = vcombine.high %v193, 0.0
    %v218 = vcombine.high %v200, 0.0
    %v219 = vcombine.high %v209, 0.0
    %v220 = vcombine.high %v216, 0.0
    %v221 = vcombine.low %v43, %v66
    %v222 = vcombine.high %v43, %v66
    %v224 = vunpack.c.l.s4 1983009808
    %v225 = vunpack.c.0.s8 %v224
    %v226 = vlaneseq
    %v227 = vshrl.u32 %v226, 7
    %v228 = vsub.s32 %v225, %v227
    %v229 = vrot.slane %v221, %v228
    %v231 = vunpack.c.l.s4 1983009808
    %v232 = vunpack.c.0.s8 %v231
    %v233 = vlaneseq
    %v234 = vshrl.u32 %v233, 7
    %v235 = vsub.s32 %v232, %v234
    %v236 = vrot.slane %v222, %v235
    %v237 = vcombine.low %v54, %v78
    %v238 = vcombine.high %v54, %v78
    %v240 = vunpack.c.l.s4 1983009808
    %v241 = vunpack.c.0.s8 %v240
    %v242 = vlaneseq
    %v243 = vshrl.u32 %v242, 7
    %v244 = vsub.s32 %v241, %v243
    %v245 = vrot.slane %v237, %v244
    %v247 = vunpack.c.l.s4 1983009808
    %v248 = vunpack.c.0.s8 %v247
    %v249 = vlaneseq
    %v250 = vshrl.u32 %v249, 7
    %v251 = vsub.s32 %v248, %v250
    %v252 = vrot.slane %v238, %v251
    %v253 = vcombine.low %v229, %v245
    %v254 = vcombine.high %v229, %v245
    %v256 = vunpack.c.l.s4 1934713408
    %v257 = vunpack.c.0.s8 %v256
    %v258 = vlaneseq
    %v259 = vshrl.u32 %v258, 7
    %v260 = vsub.s32 %v257, %v259
    %v261 = vrot.slane %v253, %v260
    %v263 = vunpack.c.l.s4 1934713408
    %v264 = vunpack.c.0.s8 %v263
    %v265 = vlaneseq
    %v266 = vshrl.u32 %v265, 7
    %v267 = vsub.s32 %v264, %v266
    %v268 = vrot.slane %v254, %v267
    %v269 = vcombine.low %v236, %v252
    %v270 = vcombine.high %v236, %v252
    %v272 = vunpack.c.l.s4 1934713408
    %v273 = vunpack.c.0.s8 %v272
    %v274 = vlaneseq
    %v275 = vshrl.u32 %v274, 7
    %v276 = vsub.s32 %v273, %v275
    %v277 = vrot.slane %v269, %v276
    %v279 = vunpack.c.l.s4 1934713408
    %v280 = vunpack.c.0.s8 %v279
    %v281 = vlaneseq
    %v282 = vshrl.u32 %v281, 7
    %v283 = vsub.s32 %v280, %v282
    %v284 = vrot.slane %v270, %v283
    %v285 = vcombine.high %v261, 0.0
    %v286 = vcombine.high %v268, 0.0
    %v287 = vcombine.high %v277, 0.0
    %v288 = vcombine.high %v284, 0.0
    %v289 = vcombine.low %v44, %v68
    %v290 = vcombine.high %v44, %v68
    %v292 = vunpack.c.l.s4 1983009808
    %v293 = vunpack.c.0.s8 %v292
    %v294 = vlaneseq
    %v295 = vshrl.u32 %v294, 7
    %v296 = vsub.s32 %v293, %v295
    %v297 = vrot.slane %v289, %v296
    %v299 = vunpack.c.l.s4 1983009808
    %v300 = vunpack.c.0.s8 %v299
    %v301 = vlaneseq
    %v302 = vshrl.u32 %v301, 7
    %v303 = vsub.s32 %v300, %v302
    %v304 = vrot.slane %v290, %v303
    %v305 = vcombine.low %v56, %v80
    %v306 = vcombine.high %v56, %v80
    %v308 = vunpack.c.l.s4 1983009808
    %v309 = vunpack.c.0.s8 %v308
    %v310 = vlaneseq
    %v311 = vshrl.u32 %v310, 7
    %v312 = vsub.s32 %v309, %v311
    %v313 = vrot.slane %v305, %v312
    %v315 = vunpack.c.l.s4 1983009808
    %v316 = vunpack.c.0.s8 %v315
    %v317 = vlaneseq
    %v318 = vshrl.u32 %v317, 7
    %v319 = vsub.s32 %v316, %v318
    %v320 = vrot.slane %v306, %v319
    %v321 = vcombine.low %v297, %v313
    %v322 = vcombine.high %v297, %v313
    %v324 = vunpack.c.l.s4 1934713408
    %v325 = vunpack.c.0.s8 %v324
    %v326 = vlaneseq
    %v327 = vshrl.u32 %v326, 7
    %v328 = vsub.s32 %v325, %v327
    %v329 = vrot.slane %v321, %v328
    %v331 = vunpack.c.l.s4 1934713408
    %v332 = vunpack.c.0.s8 %v331
    %v333 = vlaneseq
    %v334 = vshrl.u32 %v333, 7
    %v335 = vsub.s32 %v332, %v334
    %v336 = vrot.slane %v322, %v335
    %v337 = vcombine.low %v304, %v320
    %v338 = vcombine.high %v304, %v320
    %v340 = vunpack.c.l.s4 1934713408
    %v341 = vunpack.c.0.s8 %v340
    %v342 = vlaneseq
    %v343 = vshrl.u32 %v342, 7
    %v344 = vsub.s32 %v341, %v343
    %v345 = vrot.slane %v337, %v344
    %v347 = vunpack.c.l.s4 1934713408
    %v348 = vunpack.c.0.s8 %v347
    %v349 = vlaneseq
    %v350 = vshrl.u32 %v349, 7
    %v351 = vsub.s32 %v348, %v350
    %v352 = vrot.slane %v338, %v351
    %v353 = vcombine.high %v329, 0.0
    %v354 = vcombine.high %v336, 0.0
    %v355 = vcombine.high %v345, 0.0
    %v356 = vcombine.high %v352, 0.0
    %vm357 = vcmask 257024
    %v358 = vsel %vm357, %v125, 0.0
    %359 = vadd.xlane.f32.xlu0 %v358
    %v360 = vpop.xlane.xlu0 %359
    %v361 = vsel %vm357, %v149, 0.0
    %362 = vadd.xlane.f32.xlu0 %v361
    %v363 = vpop.xlane.xlu0 %362
    %v364 = vsel %vm357, %v132, 0.0
    %365 = vadd.xlane.f32.xlu0 %v364
    %v366 = vpop.xlane.xlu0 %365
    %v367 = vsel %vm357, %v150, 0.0
    %368 = vadd.xlane.f32.xlu0 %v367
    %v369 = vpop.xlane.xlu0 %368
    %v370 = vsel %vm357, %v141, 0.0
    %371 = vadd.xlane.f32.xlu0 %v370
    %v372 = vpop.xlane.xlu0 %371
    %v373 = vsel %vm357, %v151, 0.0
    %374 = vadd.xlane.f32.xlu0 %v373
    %v375 = vpop.xlane.xlu0 %374
    %v376 = vsel %vm357, %v148, 0.0
    %377 = vadd.xlane.f32.xlu0 %v376
    %v378 = vpop.xlane.xlu0 %377
    %v379 = vsel %vm357, %v152, 0.0
    %380 = vadd.xlane.f32.xlu0 %v379
    %v381 = vpop.xlane.xlu0 %380
    %v382 = vsel %vm357, %v193, 0.0
    %383 = vadd.xlane.f32.xlu0 %v382
    %v384 = vpop.xlane.xlu0 %383
    %v385 = vsel %vm357, %v217, 0.0
    %386 = vadd.xlane.f32.xlu0 %v385
    %v387 = vpop.xlane.xlu0 %386
    %v388 = vsel %vm357, %v200, 0.0
    %389 = vadd.xlane.f32.xlu0 %v388
    %v390 = vpop.xlane.xlu0 %389
    %v391 = vsel %vm357, %v218, 0.0
    %392 = vadd.xlane.f32.xlu0 %v391
    %v393 = vpop.xlane.xlu0 %392
    %v394 = vsel %vm357, %v209, 0.0
    %395 = vadd.xlane.f32.xlu0 %v394
    %v396 = vpop.xlane.xlu0 %395
    %v397 = vsel %vm357, %v219, 0.0
    %398 = vadd.xlane.f32.xlu0 %v397
    %v399 = vpop.xlane.xlu0 %398
    %v400 = vsel %vm357, %v216, 0.0
    %401 = vadd.xlane.f32.xlu0 %v400
    %v402 = vpop.xlane.xlu0 %401
    %v403 = vsel %vm357, %v220, 0.0
    %404 = vadd.xlane.f32.xlu0 %v403
    %v405 = vpop.xlane.xlu0 %404
    %v406 = vsel %vm357, %v261, 0.0
    %407 = vadd.xlane.f32.xlu0 %v406
    %v408 = vpop.xlane.xlu0 %407
    %v409 = vsel %vm357, %v285, 0.0
    %410 = vadd.xlane.f32.xlu0 %v409
    %v411 = vpop.xlane.xlu0 %410
    %v412 = vsel %vm357, %v268, 0.0
    %413 = vadd.xlane.f32.xlu0 %v412
    %v414 = vpop.xlane.xlu0 %413
    %v415 = vsel %vm357, %v286, 0.0
    %416 = vadd.xlane.f32.xlu0 %v415
    %v417 = vpop.xlane.xlu0 %416
    %v418 = vsel %vm357, %v277, 0.0
    %419 = vadd.xlane.f32.xlu0 %v418
    %v420 = vpop.xlane.xlu0 %419
    %v421 = vsel %vm357, %v287, 0.0
    %422 = vadd.xlane.f32.xlu0 %v421
    %v423 = vpop.xlane.xlu0 %422
    %v424 = vsel %vm357, %v284, 0.0
    %425 = vadd.xlane.f32.xlu0 %v424
    %v426 = vpop.xlane.xlu0 %425
    %v427 = vsel %vm357, %v288, 0.0
    %428 = vadd.xlane.f32.xlu0 %v427
    %v429 = vpop.xlane.xlu0 %428
    %v430 = vsel %vm357, %v329, 0.0
    %431 = vadd.xlane.f32.xlu0 %v430
    %v432 = vpop.xlane.xlu0 %431
    %v433 = vsel %vm357, %v353, 0.0
    %434 = vadd.xlane.f32.xlu0 %v433
    %v435 = vpop.xlane.xlu0 %434
    %v436 = vsel %vm357, %v336, 0.0
    %437 = vadd.xlane.f32.xlu0 %v436
    %v438 = vpop.xlane.xlu0 %437
    %v439 = vsel %vm357, %v354, 0.0
    %440 = vadd.xlane.f32.xlu0 %v439
    %v441 = vpop.xlane.xlu0 %440
    %v442 = vsel %vm357, %v345, 0.0
    %443 = vadd.xlane.f32.xlu0 %v442
    %v444 = vpop.xlane.xlu0 %443
    %v445 = vsel %vm357, %v355, 0.0
    %446 = vadd.xlane.f32.xlu0 %v445
    %v447 = vpop.xlane.xlu0 %446
    %v448 = vsel %vm357, %v352, 0.0
    %449 = vadd.xlane.f32.xlu0 %v448
    %v450 = vpop.xlane.xlu0 %449
    %v451 = vsel %vm357, %v356, 0.0
    %452 = vadd.xlane.f32.xlu0 %v451
    %v453 = vpop.xlane.xlu0 %452
    %s454 = sld [smem:[#allocation2]]
    %v455 = vstv %s454
    %v456 = vadd.f32 %v360, %v455
    %v457 = vadd.f32 %v363, %v455
    %v458 = vadd.f32 %v366, %v455
    %v459 = vadd.f32 %v369, %v455
    %v460 = vadd.f32 %v372, %v455
    %v461 = vadd.f32 %v375, %v455
    %v462 = vadd.f32 %v378, %v455
    %v463 = vadd.f32 %v381, %v455
    %v464 = vadd.f32 %v384, %v455
    %v465 = vadd.f32 %v387, %v455
    %v466 = vadd.f32 %v390, %v455
    %v467 = vadd.f32 %v393, %v455
    %v468 = vadd.f32 %v396, %v455
    %v469 = vadd.f32 %v399, %v455
    %v470 = vadd.f32 %v402, %v455
    %v471 = vadd.f32 %v405, %v455
    %v472 = vadd.f32 %v408, %v455
    %v473 = vadd.f32 %v411, %v455
    %v474 = vadd.f32 %v414, %v455
    %v475 = vadd.f32 %v417, %v455
    %v476 = vadd.f32 %v420, %v455
    %v477 = vadd.f32 %v423, %v455
    %v478 = vadd.f32 %v426, %v455
    %v479 = vadd.f32 %v429, %v455
    %v480 = vadd.f32 %v432, %v455
    %v481 = vadd.f32 %v435, %v455
    %v482 = vadd.f32 %v438, %v455
    %v483 = vadd.f32 %v441, %v455
    %v484 = vadd.f32 %v444, %v455
    %v485 = vadd.f32 %v447, %v455
    %v486 = vadd.f32 %v450, %v455
    %v487 = vadd.f32 %v453, %v455
    %v488 = vxor.u32 %v456, 2147483648
    %v489 = vxor.u32 %v457, 2147483648
    %v490 = vxor.u32 %v458, 2147483648
    %v491 = vxor.u32 %v459, 2147483648
    %v492 = vxor.u32 %v460, 2147483648
    %v493 = vxor.u32 %v461, 2147483648
    %v494 = vxor.u32 %v462, 2147483648
    %v495 = vxor.u32 %v463, 2147483648
    %v496 = vxor.u32 %v464, 2147483648
    %v497 = vxor.u32 %v465, 2147483648
    %v498 = vxor.u32 %v466, 2147483648
    %v499 = vxor.u32 %v467, 2147483648
    %v500 = vxor.u32 %v468, 2147483648
    %v501 = vxor.u32 %v469, 2147483648
    %v502 = vxor.u32 %v470, 2147483648
    %v503 = vxor.u32 %v471, 2147483648
    %v504 = vxor.u32 %v472, 2147483648
    %v505 = vxor.u32 %v473, 2147483648
    %v506 = vxor.u32 %v474, 2147483648
    %v507 = vxor.u32 %v475, 2147483648
    %v508 = vxor.u32 %v476, 2147483648
    %v509 = vxor.u32 %v477, 2147483648
    %v510 = vxor.u32 %v478, 2147483648
    %v511 = vxor.u32 %v479, 2147483648
    %v512 = vxor.u32 %v480, 2147483648
    %v513 = vxor.u32 %v481, 2147483648
    %v514 = vxor.u32 %v482, 2147483648
    %v515 = vxor.u32 %v483, 2147483648
    %v516 = vxor.u32 %v484, 2147483648
    %v517 = vxor.u32 %v485, 2147483648
    %v518 = vxor.u32 %v486, 2147483648
    %v519 = vxor.u32 %v487, 2147483648
    %v520 = vmul.f32 %v488, 1.442695
    %v521 = vpow.pop %v520
    %v522 = vmul.f32 %v489, 1.442695
    %v523 = vpow.pop %v522
    %v524 = vmul.f32 %v490, 1.442695
    %v525 = vpow.pop %v524
    %v526 = vmul.f32 %v491, 1.442695
    %v527 = vpow.pop %v526
    %v528 = vmul.f32 %v492, 1.442695
    %v529 = vpow.pop %v528
    %v530 = vmul.f32 %v493, 1.442695
    %v531 = vpow.pop %v530
    %v532 = vmul.f32 %v494, 1.442695
    %v533 = vpow.pop %v532
    %v534 = vmul.f32 %v495, 1.442695
    %v535 = vpow.pop %v534
    %v536 = vmul.f32 %v496, 1.442695
    %v537 = vpow.pop %v536
    %v538 = vmul.f32 %v497, 1.442695
    %v539 = vpow.pop %v538
    %v540 = vmul.f32 %v498, 1.442695
    %v541 = vpow.pop %v540
    %v542 = vmul.f32 %v499, 1.442695
    %v543 = vpow.pop %v542
    %v544 = vmul.f32 %v500, 1.442695
    %v545 = vpow.pop %v544
    %v546 = vmul.f32 %v501, 1.442695
    %v547 = vpow.pop %v546
    %v548 = vmul.f32 %v502, 1.442695
    %v549 = vpow.pop %v548
    %v550 = vmul.f32 %v503, 1.442695
    %v551 = vpow.pop %v550
    %v552 = vmul.f32 %v504, 1.442695
    %v553 = vpow.pop %v552
    %v554 = vmul.f32 %v505, 1.442695
    %v555 = vpow.pop %v554
    %v556 = vmul.f32 %v506, 1.442695
    %v557 = vpow.pop %v556
    %v558 = vmul.f32 %v507, 1.442695
    %v559 = vpow.pop %v558
    %v560 = vmul.f32 %v508, 1.442695
    %v561 = vpow.pop %v560
    %v562 = vmul.f32 %v509, 1.442695
    %v563 = vpow.pop %v562
    %v564 = vmul.f32 %v510, 1.442695
    %v565 = vpow.pop %v564
    %v566 = vmul.f32 %v511, 1.442695
    %v567 = vpow.pop %v566
    %v568 = vmul.f32 %v512, 1.442695
    %v569 = vpow.pop %v568
    %v570 = vmul.f32 %v513, 1.442695
    %v571 = vpow.pop %v570
    %v572 = vmul.f32 %v514, 1.442695
    %v573 = vpow.pop %v572
    %v574 = vmul.f32 %v515, 1.442695
    %v575 = vpow.pop %v574
    %v576 = vmul.f32 %v516, 1.442695
    %v577 = vpow.pop %v576
    %v578 = vmul.f32 %v517, 1.442695
    %v579 = vpow.pop %v578
    %v580 = vmul.f32 %v518, 1.442695
    %v581 = vpow.pop %v580
    %v582 = vmul.f32 %v519, 1.442695
    %v583 = vpow.pop %v582
    %v584 = vadd.f32 %v521, 1.0
    %v585 = vadd.f32 %v523, 1.0
    %v586 = vadd.f32 %v525, 1.0
    %v587 = vadd.f32 %v527, 1.0
    %v588 = vadd.f32 %v529, 1.0
    %v589 = vadd.f32 %v531, 1.0
    %v590 = vadd.f32 %v533, 1.0
    %v591 = vadd.f32 %v535, 1.0
    %v592 = vadd.f32 %v537, 1.0
    %v593 = vadd.f32 %v539, 1.0
    %v594 = vadd.f32 %v541, 1.0
    %v595 = vadd.f32 %v543, 1.0
    %v596 = vadd.f32 %v545, 1.0
    %v597 = vadd.f32 %v547, 1.0
    %v598 = vadd.f32 %v549, 1.0
    %v599 = vadd.f32 %v551, 1.0
    %v600 = vadd.f32 %v553, 1.0
    %v601 = vadd.f32 %v555, 1.0
    %v602 = vadd.f32 %v557, 1.0
    %v603 = vadd.f32 %v559, 1.0
    %v604 = vadd.f32 %v561, 1.0
    %v605 = vadd.f32 %v563, 1.0
    %v606 = vadd.f32 %v565, 1.0
    %v607 = vadd.f32 %v567, 1.0
    %v608 = vadd.f32 %v569, 1.0
    %v609 = vadd.f32 %v571, 1.0
    %v610 = vadd.f32 %v573, 1.0
    %v611 = vadd.f32 %v575, 1.0
    %v612 = vadd.f32 %v577, 1.0
    %v613 = vadd.f32 %v579, 1.0
    %v614 = vadd.f32 %v581, 1.0
    %v615 = vadd.f32 %v583, 1.0
    %v616 = vrcp.pop %v584
    %v617 = vmul.f32 1.0, %v616
    %v618 = vrcp.pop %v585
    %v619 = vmul.f32 1.0, %v618
    %v620 = vrcp.pop %v586
    %v621 = vmul.f32 1.0, %v620
    %v622 = vrcp.pop %v587
    %v623 = vmul.f32 1.0, %v622
    %v624 = vrcp.pop %v588
    %v625 = vmul.f32 1.0, %v624
    %v626 = vrcp.pop %v589
    %v627 = vmul.f32 1.0, %v626
    %v628 = vrcp.pop %v590
    %v629 = vmul.f32 1.0, %v628
    %v630 = vrcp.pop %v591
    %v631 = vmul.f32 1.0, %v630
    %v632 = vrcp.pop %v592
    %v633 = vmul.f32 1.0, %v632
    %v634 = vrcp.pop %v593
    %v635 = vmul.f32 1.0, %v634
    %v636 = vrcp.pop %v594
    %v637 = vmul.f32 1.0, %v636
    %v638 = vrcp.pop %v595
    %v639 = vmul.f32 1.0, %v638
    %v640 = vrcp.pop %v596
    %v641 = vmul.f32 1.0, %v640
    %v642 = vrcp.pop %v597
    %v643 = vmul.f32 1.0, %v642
    %v644 = vrcp.pop %v598
    %v645 = vmul.f32 1.0, %v644
    %v646 = vrcp.pop %v599
    %v647 = vmul.f32 1.0, %v646
    %v648 = vrcp.pop %v600
    %v649 = vmul.f32 1.0, %v648
    %v650 = vrcp.pop %v601
    %v651 = vmul.f32 1.0, %v650
    %v652 = vrcp.pop %v602
    %v653 = vmul.f32 1.0, %v652
    %v654 = vrcp.pop %v603
    %v655 = vmul.f32 1.0, %v654
    %v656 = vrcp.pop %v604
    %v657 = vmul.f32 1.0, %v656
    %v658 = vrcp.pop %v605
    %v659 = vmul.f32 1.0, %v658
    %v660 = vrcp.pop %v606
    %v661 = vmul.f32 1.0, %v660
    %v662 = vrcp.pop %v607
    %v663 = vmul.f32 1.0, %v662
    %v664 = vrcp.pop %v608
    %v665 = vmul.f32 1.0, %v664
    %v666 = vrcp.pop %v609
    %v667 = vmul.f32 1.0, %v666
    %v668 = vrcp.pop %v610
    %v669 = vmul.f32 1.0, %v668
    %v670 = vrcp.pop %v611
    %v671 = vmul.f32 1.0, %v670
    %v672 = vrcp.pop %v612
    %v673 = vmul.f32 1.0, %v672
    %v674 = vrcp.pop %v613
    %v675 = vmul.f32 1.0, %v674
    %v676 = vrcp.pop %v614
    %v677 = vmul.f32 1.0, %v676
    %v678 = vrcp.pop %v615
    %v679 = vmul.f32 1.0, %v678
    %v712 = vcombine.low %v617, %v619
    %v713 = vcombine.low %v621, %v623
    %v714 = vcombine.low %v625, %v627
    %v715 = vcombine.low %v629, %v631
    %v716 = vcombine.low %v633, %v635
    %v717 = vcombine.low %v637, %v639
    %v718 = vcombine.low %v641, %v643
    %v719 = vcombine.low %v645, %v647
    %v720 = vcombine.low %v649, %v651
    %v721 = vcombine.low %v653, %v655
    %v722 = vcombine.low %v657, %v659
    %v723 = vcombine.low %v661, %v663
    %v724 = vcombine.low %v665, %v667
    %v725 = vcombine.low %v669, %v671
    %v726 = vcombine.low %v673, %v675
    %v727 = vcombine.low %v677, %v679
    %728 = vset.pattern.permute.xlu0 0
    %729 = vperm.xlu0 %728, %v712
    %v730 = vpop.permute.xlu0 %729
    %731 = vset.pattern.permute.xlu0 0
    %732 = vperm.xlu0 %731, %v713
    %v733 = vpop.permute.xlu0 %732
    %734 = vset.pattern.permute.xlu0 0
    %735 = vperm.xlu0 %734, %v714
    %v736 = vpop.permute.xlu0 %735
    %737 = vset.pattern.permute.xlu0 0
    %738 = vperm.xlu0 %737, %v715
    %v739 = vpop.permute.xlu0 %738
    %740 = vset.pattern.permute.xlu0 0
    %741 = vperm.xlu0 %740, %v716
    %v742 = vpop.permute.xlu0 %741
    %743 = vset.pattern.permute.xlu0 0
    %744 = vperm.xlu0 %743, %v717
    %v745 = vpop.permute.xlu0 %744
    %746 = vset.pattern.permute.xlu0 0
    %747 = vperm.xlu0 %746, %v718
    %v748 = vpop.permute.xlu0 %747
    %749 = vset.pattern.permute.xlu0 0
    %750 = vperm.xlu0 %749, %v719
    %v751 = vpop.permute.xlu0 %750
    %752 = vset.pattern.permute.xlu0 0
    %753 = vperm.xlu0 %752, %v720
    %v754 = vpop.permute.xlu0 %753
    %755 = vset.pattern.permute.xlu0 0
    %756 = vperm.xlu0 %755, %v721
    %v757 = vpop.permute.xlu0 %756
    %758 = vset.pattern.permute.xlu0 0
    %759 = vperm.xlu0 %758, %v722
    %v760 = vpop.permute.xlu0 %759
    %761 = vset.pattern.permute.xlu0 0
    %762 = vperm.xlu0 %761, %v723
    %v763 = vpop.permute.xlu0 %762
    %764 = vset.pattern.permute.xlu0 0
    %765 = vperm.xlu0 %764, %v724
    %v766 = vpop.permute.xlu0 %765
    %767 = vset.pattern.permute.xlu0 0
    %768 = vperm.xlu0 %767, %v725
    %v769 = vpop.permute.xlu0 %768
    %770 = vset.pattern.permute.xlu0 0
    %771 = vperm.xlu0 %770, %v726
    %v772 = vpop.permute.xlu0 %771
    %773 = vset.pattern.permute.xlu0 0
    %774 = vperm.xlu0 %773, %v727
    %v775 = vpop.permute.xlu0 %774
    %v776 = vlaneseq
    %v777 = vand.u32 %v776, 127
    %v778 = vlaneseq
    %v779 = vshrl.u32 %v778, 7
    %v780 = vsub.s32 %v777, %v779
    %v781 = vrot.slane %v730, %v780
    %v782 = vadd.s32 %v777, 4294967288
    %v783 = vlaneseq
    %v784 = vshrl.u32 %v783, 7
    %v785 = vsub.s32 %v782, %v784
    %v786 = vrot.slane %v733, %v785
    %vm787 = vcmask 130112
    %v788 = vsel %vm787, %v786, %v781
    %v789 = vadd.s32 %v777, 4294967280
    %v790 = vlaneseq
    %v791 = vshrl.u32 %v790, 7
    %v792 = vsub.s32 %v789, %v791
    %v793 = vrot.slane %v736, %v792
    %vm794 = vcmask 195712
    %v795 = vsel %vm794, %v793, %v788
    %v796 = vadd.s32 %v777, 4294967272
    %v797 = vlaneseq
    %v798 = vshrl.u32 %v797, 7
    %v799 = vsub.s32 %v796, %v798
    %v800 = vrot.slane %v739, %v799
    %vm801 = vcmask 261312
    %v802 = vsel %vm801, %v800, %v795
    %v803 = vadd.s32 %v777, 4294967264
    %v804 = vlaneseq
    %v805 = vshrl.u32 %v804, 7
    %v806 = vsub.s32 %v803, %v805
    %v807 = vrot.slane %v742, %v806
    %vm808 = vcmask 326912
    %v809 = vsel %vm808, %v807, %v802
    %v810 = vadd.s32 %v777, 4294967256
    %v811 = vlaneseq
    %v812 = vshrl.u32 %v811, 7
    %v813 = vsub.s32 %v810, %v812
    %v814 = vrot.slane %v745, %v813
    %vm815 = vcmask 392512
    %v816 = vsel %vm815, %v814, %v809
    %v817 = vadd.s32 %v777, 4294967248
    %v818 = vlaneseq
    %v819 = vshrl.u32 %v818, 7
    %v820 = vsub.s32 %v817, %v819
    %v821 = vrot.slane %v748, %v820
    %vm822 = vcmask 458112
    %v823 = vsel %vm822, %v821, %v816
    %v824 = vadd.s32 %v777, 4294967240
    %v825 = vlaneseq
    %v826 = vshrl.u32 %v825, 7
    %v827 = vsub.s32 %v824, %v826
    %v828 = vrot.slane %v751, %v827
    %vm829 = vcmask 523712
    %v830 = vsel %vm829, %v828, %v823
    %v831 = vadd.s32 %v777, 4294967232
    %v832 = vlaneseq
    %v833 = vshrl.u32 %v832, 7
    %v834 = vsub.s32 %v831, %v833
    %v835 = vrot.slane %v754, %v834
    %vm836 = vcmask 589312
    %v837 = vsel %vm836, %v835, %v830
    %v838 = vadd.s32 %v777, 4294967224
    %v839 = vlaneseq
    %v840 = vshrl.u32 %v839, 7
    %v841 = vsub.s32 %v838, %v840
    %v842 = vrot.slane %v757, %v841
    %vm843 = vcmask 654912
    %v844 = vsel %vm843, %v842, %v837
    %v845 = vadd.s32 %v777, 4294967216
    %v846 = vlaneseq
    %v847 = vshrl.u32 %v846, 7
    %v848 = vsub.s32 %v845, %v847
    %v849 = vrot.slane %v760, %v848
    %vm850 = vcmask 720512
    %v851 = vsel %vm850, %v849, %v844
    %v852 = vadd.s32 %v777, 4294967208
    %v853 = vlaneseq
    %v854 = vshrl.u32 %v853, 7
    %v855 = vsub.s32 %v852, %v854
    %v856 = vrot.slane %v763, %v855
    %vm857 = vcmask 786112
    %v858 = vsel %vm857, %v856, %v851
    %v859 = vadd.s32 %v777, 4294967200
    %v860 = vlaneseq
    %v861 = vshrl.u32 %v860, 7
    %v862 = vsub.s32 %v859, %v861
    %v863 = vrot.slane %v766, %v862
    %vm864 = vcmask 851712
    %v865 = vsel %vm864, %v863, %v858
    %v866 = vadd.s32 %v777, 4294967192
    %v867 = vlaneseq
    %v868 = vshrl.u32 %v867, 7
    %v869 = vsub.s32 %v866, %v868
    %v870 = vrot.slane %v769, %v869
    %vm871 = vcmask 917312
    %v872 = vsel %vm871, %v870, %v865
    %v873 = vadd.s32 %v777, 4294967184
    %v874 = vlaneseq
    %v875 = vshrl.u32 %v874, 7
    %v876 = vsub.s32 %v873, %v875
    %v877 = vrot.slane %v772, %v876
    %vm878 = vcmask 982912
    %v879 = vsel %vm878, %v877, %v872
    %v880 = vadd.s32 %v777, 4294967176
    %v881 = vlaneseq
    %v882 = vshrl.u32 %v881, 7
    %v883 = vsub.s32 %v880, %v882
    %v884 = vrot.slane %v775, %v883
    %vm885 = vcmask 1048512
    %v886 = vsel %vm885, %v884, %v879
    %888 = vst [vmem:[#allocation6] sm:$0x1] %v886
    // Predicated region
    $region18: #{tpu_custom_call.1} parent=1 // pred_check
      _
    $region19: #{tpu_custom_call.1} parent=1 // pred_check_branch
      %890 = sbr.rel (0) target = $region21
    $region20: #{tpu_custom_call.1} parent=1 // pred_region
      %s892 = ssub.s32 16, 16
      %893 = vsyncadd [#allocation5], %s892
      %s895 = sshll.u32 [#allocation6], 4
      %s896 = int_to_ptr.vmem [resolvable:$true] %s895
      %898 = dma.vmem_to_hbm [thread:$0]  %s896, 16, %s3, [#allocation5]
    $region21: #{tpu_custom_call.1} parent=1 // pred_fallthru
      _
    // Predicated region
    $region22: #{tpu_custom_call.1} parent=1 // pred_check
      _
    $region23: #{tpu_custom_call.1} parent=1 // pred_check_branch
      %900 = sbr.rel (0) target = $region25
    $region24: #{tpu_custom_call.1} parent=1 // pred_region
      %901 = dma.done [#allocation5], 16
    $region25: #{tpu_custom_call.1} parent=1 // pred_fallthru
      _
    %902 = vsyncpa [#allocation4], 1
    %903 = vsyncpa [#allocation5], 1

</llo_original>
